<compile_context>
chip_gen: v7x
topology: tpu7x:2x2x1
jax: 0.10.0
libtpu: 0.0.40
codegen_flags: <defaults>
</compile_context>

<pallas_src>
import functools

import jax
import jax.numpy as jnp
from jax.experimental import pallas as pl
from jax.experimental.pallas import tpu as pltpu


def _round_up(x, m):
    return ((x + m - 1) // m) * m


# ----------------- Kernel 1: transposed, lane-dense MLP ------------------- #
def _dpb_mlp_kernel(pos_ref, slab_ref, out_ref, *, log_distance, depth, dim,
                    heads, mxu_bf16):
    """Runs the whole MLP transposed: activations are (dim, TN), output (heads, TN).

    pos_ref  : (1, TN)               position tile (lane-major)
    slab_ref : (depth+1, R, dim+1)   packed params; layer k: [:, :dim] = W_k^T,
               [:, dim] = b_k  (layer 0 uses column 0 only; final uses :heads rows)
    out_ref  : (heads, TN)           lane-dense output tile
    """
    p = pos_ref[...].astype(jnp.float32)                            # (1, TN)
    if log_distance:
        p = jnp.sign(p) * jnp.log(jnp.abs(p) + 1.0)

    # Layer 0: Linear(1, dim) -> broadcast mul + add (no degenerate K=1 matmul).
    s0 = slab_ref[0]                                                # (R, dim+1)
    h = jnp.maximum(s0[:dim, 0:1] * p + s0[:dim, dim:dim + 1], 0.0)  # (dim, TN)

    # Hidden layers (depth-1 of them), transposed: h <- relu(W^T @ h + b).
    for k in range(1, depth):
        sk = slab_ref[k]
        wk = sk[:dim, :dim]
        bk = sk[:dim, dim:dim + 1]
        if mxu_bf16:   # v6e MXU hint; default off to keep f32-reference tolerance
            wk = wk.astype(jnp.bfloat16)
            h = h.astype(jnp.bfloat16)
        h = jnp.maximum(jnp.dot(wk, h, preferred_element_type=jnp.float32) + bk, 0.0)

    # Final projection: Linear(dim, heads) -> (heads, TN).
    sf = slab_ref[depth]
    wf = sf[:heads, :dim]
    bf = sf[:heads, dim:dim + 1]
    if mxu_bf16:
        wf = wf.astype(jnp.bfloat16)
        h = h.astype(jnp.bfloat16)
    out = jnp.dot(wf, h, preferred_element_type=jnp.float32) + bf
    out_ref[...] = out.astype(out_ref.dtype)


# --------- Kernel 2: fused gather + final (b, h, i, j) layout write -------- #
def _dpb_gather_kernel(tab_ref, idx_ref, out_ref, *, tile_i):
    """out[0, h, a, j] = tab[h, idx[a, j]]  via one-hot MXU matmul per i-row.

    tab_ref : (heads, Np)           full MLP table, resident in VMEM
    idx_ref : (1, tile_i, Jp)       int32 indices tile
    out_ref : (1, heads, tile_i, Jp) final-layout output tile (j lane-dense)
    """
    tab = tab_ref[...]                                              # (heads, Np)
    idx = idx_ref[0]                                                # (tile_i, Jp)
    n_pad = tab.shape[1]
    j_pad = idx.shape[1]
    iota_n = jax.lax.broadcasted_iota(jnp.int32, (n_pad, j_pad), 0)  # row index
    for a in range(tile_i):
        onehot = (iota_n == idx[a:a + 1, :]).astype(tab.dtype)      # (Np, Jp)
        vals = jnp.dot(tab, onehot, preferred_element_type=jnp.float32)  # (heads, Jp)
        out_ref[0, :, a, :] = vals.astype(out_ref.dtype)


# -------------------------------- Wrapper ---------------------------------- #
def dynamic_position_bias(pos, indices, params, *, log_distance=False,
                          out_dtype=jnp.float32, mxu_bf16=False,
                          batch_invariant_indices=False,
                          gather_fuse_max_n=512):
    """Pallas implementation of DynamicPositionBias.forward.

    pos     : (N, 1) float  relative positions
    indices : (b, i, j) int indices into the N rows (must be in [0, N))
    params  : (w0 (1,dim), b0 (dim,), hidden [(w (dim,dim), b (dim,)), ...],
               wf (dim,heads), bf (heads,))
    returns : (b, heads, i, j) in `out_dtype`
    """
    w0, b0, hidden, wf, bf = params
    dim = w0.shape[1]
    heads = wf.shape[1]
    depth = len(hidden) + 1
    N = pos.shape[0]

    # ---- 1) MLP table over all positions, transposed: (heads, n_pad) ----
    if N <= 4096:                       # collapse to a single grid step
        tile_n = _round_up(N, 128)
        n_pad = tile_n
    else:                               # big N: 1024-wide parallel tiles (>= 2 steps)
        tile_n = 1024
        n_pad = _round_up(N, tile_n)
    pos_t = jnp.pad(pos.astype(jnp.float32).reshape(1, N), ((0, 0), (0, n_pad - N)))

    # Pack every weight/bias into one slab -> a single constant-index BlockSpec.
    R = max(dim, heads)
    C = dim + 1
    slab = jnp.zeros((depth + 1, R, C), jnp.float32)
    slab = slab.at[0, :dim, 0].set(w0.astype(jnp.float32)[0, :])
    slab = slab.at[0, :dim, dim].set(b0.astype(jnp.float32))
    for k, (wk, bk) in enumerate(hidden, start=1):
        slab = slab.at[k, :dim, :dim].set(wk.astype(jnp.float32).T)
        slab = slab.at[k, :dim, dim].set(bk.astype(jnp.float32))
    slab = slab.at[depth, :heads, :dim].set(wf.astype(jnp.float32).T)
    slab = slab.at[depth, :heads, dim].set(bf.astype(jnp.float32))

    table = pl.pallas_call(
        functools.partial(_dpb_mlp_kernel, log_distance=log_distance, depth=depth,
                          dim=dim, heads=heads, mxu_bf16=mxu_bf16),
        out_shape=jax.ShapeDtypeStruct((heads, n_pad), jnp.float32),
        grid_spec=pltpu.PrefetchScalarGridSpec(
            num_scalar_prefetch=0,
            grid=(n_pad // tile_n,),
            in_specs=[
                pl.BlockSpec((1, tile_n), lambda i: (0, i)),
                pl.BlockSpec((depth + 1, R, C), lambda i: (0, 0, 0)),
            ],
            out_specs=pl.BlockSpec((heads, tile_n), lambda i: (0, i)),
        ),
        compiler_params=pltpu.CompilerParams(dimension_semantics=("parallel",)),
    )(pos_t, slab)

    # ---- 2) gather by indices + emit final (b, heads, i, j) layout ----
    idx = indices.astype(jnp.int32)
    if batch_invariant_indices:
        idx = idx[:1]                    # gather once, broadcast over batch below
    b, I, J = idx.shape

    if n_pad <= gather_fuse_max_n:
        # Fused Pallas gather: the big bias tensor is written exactly once, in
        # final layout, with j on the 128-lane axis.  Grid (b, i-tiles) is fully
        # "parallel" (v7x 2-TC friendly).
        tile_i = 8
        i_pad = _round_up(I, tile_i)
        j_pad = _round_up(J, 128)
        idx_p = jnp.pad(idx, ((0, 0), (0, i_pad - I), (0, j_pad - J)))
        bias = pl.pallas_call(
            functools.partial(_dpb_gather_kernel, tile_i=tile_i),
            out_shape=jax.ShapeDtypeStruct((b, heads, i_pad, j_pad), out_dtype),
            grid_spec=pltpu.PrefetchScalarGridSpec(
                num_scalar_prefetch=0,
                grid=(b, i_pad // tile_i),
                in_specs=[
                    pl.BlockSpec((heads, n_pad), lambda bb, ii: (0, 0)),
                    pl.BlockSpec((1, tile_i, j_pad), lambda bb, ii: (bb, ii, 0)),
                ],
                out_specs=pl.BlockSpec((1, heads, tile_i, j_pad),
                                       lambda bb, ii: (bb, 0, ii, 0)),
            ),
            compiler_params=pltpu.CompilerParams(
                dimension_semantics=("parallel", "parallel")),
        )(table, idx_p)
        bias = bias[:, :, :I, :J]
    else:
        # TODO(synk): for very large N an arbitrary per-element gather has no
        # cheap one-hot/MXU mapping; left to XLA (no clamp ops via
        # promise_in_bounds), followed by a leading-axis reorder.
        tab = table[:, :N]                                          # (heads, N)
        bias = tab.at[:, idx].get(mode="promise_in_bounds")         # (heads,b,i,j)
        bias = jnp.transpose(bias, (1, 0, 2, 3)).astype(out_dtype)

    if batch_invariant_indices:
        bias = jnp.broadcast_to(bias, (indices.shape[0],) + bias.shape[1:])
    return bias


# --------------------------- Pure-JAX reference ---------------------------- #
def dynamic_position_bias_ref(pos, indices, params, *, log_distance=False):
    w0, b0, hidden, wf, bf = params
    p = pos.astype(jnp.float32)
    if log_distance:
        p = jnp.sign(p) * jnp.log(jnp.abs(p) + 1.0)
    h = jnp.maximum(p * w0 + b0, 0.0)                     # Linear(1, dim) + ReLU
    for (w, b) in hidden:
        h = jnp.maximum(h @ w + b, 0.0)
    out = h @ wf + bf                                     # (N, heads)
    bias = jnp.take(out, indices, axis=0)                 # (b, i, j, h)
    return jnp.transpose(bias, (0, 3, 1, 2))              # (b, h, i, j)


# ---------------------------------- Main ----------------------------------- #
if __name__ == "__main__":
    # Module config (defaults: log_distance=False, norm=False, activation=ReLU).
    dim, heads, depth = 32, 8, 2
    seq, batch = 8, 2

    key = jax.random.PRNGKey(0)
    k0, k1, k2, k3, k4, k5 = jax.random.split(key, 6)

    # Deterministic synthetic parameters (shapes follow nn.Linear in __init__).
    w0 = jax.random.normal(k0, (1, dim), jnp.float32) * 0.5          # Linear(1, dim)
    b0 = jax.random.normal(k1, (dim,), jnp.float32) * 0.1
    hidden = [(jax.random.normal(k2, (dim, dim), jnp.float32) * (1.0 / dim ** 0.5),
               jax.random.normal(k3, (dim,), jnp.float32) * 0.1)]    # depth-1 = 1 layer
    wf = jax.random.normal(k4, (dim, heads), jnp.float32) * (1.0 / dim ** 0.5)
    bf = jax.random.normal(k5, (heads,), jnp.float32) * 0.1
    params = (w0, b0, hidden, wf, bf)

    # Relative positions -(S-1) .. (S-1) as a column vector, and (b, i, j) indices.
    n = 2 * seq - 1
    pos = jnp.arange(-(seq - 1), seq, dtype=jnp.float32).reshape(n, 1)   # (15, 1)
    i_idx = jnp.arange(seq)[:, None]
    j_idx = jnp.arange(seq)[None, :]
    rel = (i_idx - j_idx) + (seq - 1)                                    # (S, S) in [0, N)
    indices = jnp.broadcast_to(rel[None], (batch, seq, seq)).astype(jnp.int32)

    ref = dynamic_position_bias_ref(pos, indices, params, log_distance=False)

    # 1) Default path: Pallas MLP + fused Pallas gather (final layout).
    bias = dynamic_position_bias(pos, indices, params, log_distance=False)
    bias = jax.block_until_ready(bias)
    assert bias.shape == (batch, heads, seq, seq), bias.shape
    assert jnp.allclose(bias, ref, atol=1e-4, rtol=1e-4), "fused path mismatch"

    # 2) Batch-invariant-indices fast path (gather once, broadcast over batch).
    bias_bi = dynamic_position_bias(pos, indices, params,
                                    batch_invariant_indices=True)
    bias_bi = jax.block_until_ready(bias_bi)
    assert jnp.allclose(bias_bi, ref, atol=1e-4, rtol=1e-4), "batch-inv mismatch"

    # 3) Large-N fallback path (XLA gather, promise_in_bounds), forced here.
    bias_fb = dynamic_position_bias(pos, indices, params, gather_fuse_max_n=0)
    bias_fb = jax.block_until_ready(bias_fb)
    assert jnp.allclose(bias_fb, ref, atol=1e-4, rtol=1e-4), "fallback mismatch"

    print("KERNEL_OK")
</pallas_src>

<mosaic_0001>
module attributes {stable_mosaic.version = 11 : i64} {
  func.func @_dpb_mlp_kernel(%arg0: i32, %arg1: memref<1x128xf32, #tpu.memory_space<vmem>>, %arg2: memref<3x32x33xf32, #tpu.memory_space<vmem>>, %arg3: memref<8x128xf32, #tpu.memory_space<vmem>>) attributes {dimension_semantics = [#tpu.dimension_semantics<parallel>], iteration_bounds = array<i64: 1>, scalar_prefetch = 0 : i64, scratch_operands = 0 : i64, tpu.core_type = #tpu.core_type<tc>, window_params = [{transform_indices = @transform_0, window_bounds = array<i64: 1, 128>}, {pipeline_mode = #tpu.pipeline_mode<synchronous>, transform_indices = @transform_1, window_bounds = array<i64: 3, 32, 33>}, {transform_indices = @transform_2, window_bounds = array<i64: 8, 128>}]} {
    %c0 = arith.constant 0 : index
    %c0_0 = arith.constant 0 : index
    %0 = vector.load %arg1[%c0, %c0_0] : memref<1x128xf32, #tpu.memory_space<vmem>>, vector<1x128xf32>
    %c0_1 = arith.constant 0 : index
    %c0_2 = arith.constant 0 : index
    %c0_3 = arith.constant 0 : index
    %1 = vector.load %arg2[%c0_1, %c0_2, %c0_3] : memref<3x32x33xf32, #tpu.memory_space<vmem>>, vector<1x32x33xf32>
    %2 = vector.shape_cast %1 : vector<1x32x33xf32> to vector<32x33xf32>
    %3 = vector.extract_strided_slice %2 {offsets = [0, 0], sizes = [32, 1], strides = [1, 1]} : vector<32x33xf32> to vector<32x1xf32>
    %4 = vector.broadcast %3 : vector<32x1xf32> to vector<32x128xf32>
    %5 = vector.broadcast %0 : vector<1x128xf32> to vector<32x128xf32>
    %6 = arith.mulf %4, %5 : vector<32x128xf32>
    %7 = vector.extract_strided_slice %2 {offsets = [0, 32], sizes = [32, 1], strides = [1, 1]} : vector<32x33xf32> to vector<32x1xf32>
    %8 = vector.broadcast %7 : vector<32x1xf32> to vector<32x128xf32>
    %9 = arith.addf %6, %8 : vector<32x128xf32>
    %cst = arith.constant 0.000000e+00 : f32
    %10 = vector.broadcast %cst : f32 to vector<32x128xf32>
    %11 = arith.maximumf %9, %10 : vector<32x128xf32>
    %c1 = arith.constant 1 : index
    %c0_4 = arith.constant 0 : index
    %c0_5 = arith.constant 0 : index
    %12 = vector.load %arg2[%c1, %c0_4, %c0_5] : memref<3x32x33xf32, #tpu.memory_space<vmem>>, vector<1x32x33xf32>
    %13 = vector.shape_cast %12 : vector<1x32x33xf32> to vector<32x33xf32>
    %14 = vector.extract_strided_slice %13 {offsets = [0, 0], sizes = [32, 32], strides = [1, 1]} : vector<32x33xf32> to vector<32x32xf32>
    %15 = vector.extract_strided_slice %13 {offsets = [0, 32], sizes = [32, 1], strides = [1, 1]} : vector<32x33xf32> to vector<32x1xf32>
    %cst_6 = arith.constant dense<0.000000e+00> : vector<32x128xf32>
    %16 = tpu.matmul %14, %11, %cst_6 {dimension_numbers = #tpu.dot_dimension_numbers<[1], [0], [0], [1], [0, 0, 1, 1], [], []>} : vector<32x32xf32>, vector<32x128xf32>, vector<32x128xf32> -> vector<32x128xf32>
    %17 = vector.broadcast %15 : vector<32x1xf32> to vector<32x128xf32>
    %18 = arith.addf %16, %17 : vector<32x128xf32>
    %cst_7 = arith.constant 0.000000e+00 : f32
    %19 = vector.broadcast %cst_7 : f32 to vector<32x128xf32>
    %20 = arith.maximumf %18, %19 : vector<32x128xf32>
    %c2 = arith.constant 2 : index
    %c0_8 = arith.constant 0 : index
    %c0_9 = arith.constant 0 : index
    %21 = vector.load %arg2[%c2, %c0_8, %c0_9] : memref<3x32x33xf32, #tpu.memory_space<vmem>>, vector<1x32x33xf32>
    %22 = vector.shape_cast %21 : vector<1x32x33xf32> to vector<32x33xf32>
    %23 = vector.extract_strided_slice %22 {offsets = [0, 0], sizes = [8, 32], strides = [1, 1]} : vector<32x33xf32> to vector<8x32xf32>
    %24 = vector.extract_strided_slice %22 {offsets = [0, 32], sizes = [8, 1], strides = [1, 1]} : vector<32x33xf32> to vector<8x1xf32>
    %cst_10 = arith.constant dense<0.000000e+00> : vector<8x128xf32>
    %25 = tpu.matmul %23, %20, %cst_10 {dimension_numbers = #tpu.dot_dimension_numbers<[1], [0], [0], [1], [0, 0, 1, 1], [], []>} : vector<8x32xf32>, vector<32x128xf32>, vector<8x128xf32> -> vector<8x128xf32>
    %26 = vector.broadcast %24 : vector<8x1xf32> to vector<8x128xf32>
    %27 = arith.addf %25, %26 : vector<8x128xf32>
    %c0_11 = arith.constant 0 : index
    %c0_12 = arith.constant 0 : index
    %28 = vector.load %arg3[%c0_11, %c0_12] : memref<8x128xf32, #tpu.memory_space<vmem>>, vector<8x128xf32>
    tpu.vector_store %arg3[%c0_11, %c0_12], %27 {strides = array<i32>} : memref<8x128xf32, #tpu.memory_space<vmem>>, vector<8x128xf32>,
    return
  }
  func.func @transform_0(%arg0: i32) -> (i32, i32) {
    %c0_i32 = arith.constant 0 : i32
    %c0_i32_0 = arith.constant 0 : i32
    return %c0_i32, %arg0 : i32, i32
  }
  func.func @transform_1(%arg0: i32) -> (i32, i32, i32) {
    %c0_i32 = arith.constant 0 : i32
    %c0_i32_0 = arith.constant 0 : i32
    %c0_i32_1 = arith.constant 0 : i32
    %c0_i32_2 = arith.constant 0 : i32
    return %c0_i32, %c0_i32_0, %c0_i32_1 : i32, i32, i32
  }
  func.func @transform_2(%arg0: i32) -> (i32, i32) {
    %c0_i32 = arith.constant 0 : i32
    %c0_i32_0 = arith.constant 0 : i32
    return %c0_i32, %arg0 : i32, i32
  }
}

</mosaic_0001>

<llo_original>
// kernel: tpu_custom_call.1
$region0: #{tpu_custom_call.1}
  #allocation0 [shape = 'u32[]', space=smem, size = 0x4, offset = 0x4, fixed_abs, tag = 'smem constant byte address 0x4 - core index']
  #allocation1 [shape = 'u32[144,128]{1,0:T(1,128)}', space=vmem, size = 0x12000, scoped, tag = 'internal scratch']
  %s0 = inlined_call_operand.hbm [shape: f32[1,128], index: 0, kind: input, shape index: {}]
  %s1 = inlined_call_operand.hbm [shape: f32[3,32,33], index: 1, kind: input, shape index: {}]
  %s2 = inlined_call_operand.hbm [shape: f32[8,128], index: 2, kind: output, shape index: {}]
  %s3 = sld [smem:[#allocation0]]
  $region26: #{tpu_custom_call.1} parent=0
    _
  %s5 = ssub.s32 1, %s3
  %s6 = scalar_select 0, %s5, %s3
  $region1: #{tpu_custom_call.1} parent=0
    #allocation2 [shape = 'u8[512]{0}', space=vmem, size = 0x400, scoped, tag = 'input window, operand 0, single buffered']
    #allocation3 [shape = 's32[1]{0}', space=sflag, size = 0x4, scoped, tag = 'scoped memory for tpu_custom_call.1']
    #allocation4 [shape = 's32[1]{0}', space=sflag, size = 0x4, scoped, tag = 'scoped memory for tpu_custom_call.1']
    #allocation5 [shape = 'u8[49152]{0}', space=vmem, size = 0xc000, scoped, tag = 'input window, operand 1, single buffered']
    #allocation6 [shape = 's32[1]{0}', space=sflag, size = 0x4, scoped, tag = 'scoped memory for tpu_custom_call.1']
    #allocation7 [shape = 'u8[4096]{0}', space=vmem, size = 0x1000, scoped, tag = 'output window, operand 0, single buffered']
    %7 = vsyncpa [#allocation3], 0
    %8 = vsyncpa [#allocation6], 0
    %9 = vsyncpa [#allocation4], 0
    // Predicated region
    $region2: #{tpu_custom_call.1} parent=1 // pred_check
      _
    $region3: #{tpu_custom_call.1} parent=1 // pred_check_branch
      %11 = sbr.rel (0) target = $region5
    $region4: #{tpu_custom_call.1} parent=1 // pred_region
      %s13 = ssub.s32 16, 16
      %14 = vsyncadd [#allocation3], %s13
      %s16 = sshll.u32 [#allocation2], 4
      %s17 = int_to_ptr.vmem [resolvable:$true] %s16
      %19 = dma.hbm_to_vmem [thread:$0]  %s0, 16, %s17, [#allocation3]
    $region5: #{tpu_custom_call.1} parent=1 // pred_fallthru
      _
    // Predicated region
    $region6: #{tpu_custom_call.1} parent=1 // pred_check
      _
    $region7: #{tpu_custom_call.1} parent=1 // pred_check_branch
      %21 = sbr.rel (0) target = $region9
    $region8: #{tpu_custom_call.1} parent=1 // pred_region
      %s23 = ssub.s32 1536, 1536
      %24 = vsyncadd [#allocation6], %s23
      %s25 = sshll.u32 [#allocation5], 4
      %s26 = int_to_ptr.vmem [resolvable:$true] %s25
      %31 = dma.hbm_to_vmem [thread:$0]  %s1, 1536, %s26, [#allocation6], 128, 128, 8
    $region9: #{tpu_custom_call.1} parent=1 // pred_fallthru
      _
    // Predicated region
    $region10: #{tpu_custom_call.1} parent=1 // pred_check
      _
    $region11: #{tpu_custom_call.1} parent=1 // pred_check_branch
      %33 = sbr.rel (0) target = $region13
    $region12: #{tpu_custom_call.1} parent=1 // pred_region
      %34 = dma.done [#allocation3], 16
    $region13: #{tpu_custom_call.1} parent=1 // pred_fallthru
      _
    // Predicated region
    $region14: #{tpu_custom_call.1} parent=1 // pred_check
      _
    $region15: #{tpu_custom_call.1} parent=1 // pred_check_branch
      %36 = sbr.rel (0) target = $region17
    $region16: #{tpu_custom_call.1} parent=1 // pred_region
      %37 = dma.done [#allocation6], 1536
    $region17: #{tpu_custom_call.1} parent=1 // pred_fallthru
      _
    %v38 = vld [vmem:[#allocation2] sm:$0x1]
    %v39 = vld [vmem:[#allocation5] sm:$0xff]
    %v40 = vld [vmem:[#allocation5 + $0x8] sm:$0xff]
    %v41 = vld [vmem:[#allocation5 + $0x10] sm:$0xff]
    %v42 = vld [vmem:[#allocation5 + $0x18] sm:$0xff]
    %44 = vset.pattern.permute.xlu0 0
    %45 = vperm.xlu0 %44, %v39
    %v46 = vpop.permute.xlu0 %45
    %49 = vset.pattern.permute.xlu0 0
    %50 = vperm.xlu0 %49, %v40
    %v51 = vpop.permute.xlu0 %50
    %54 = vset.pattern.permute.xlu0 0
    %55 = vperm.xlu0 %54, %v41
    %v56 = vpop.permute.xlu0 %55
    %59 = vset.pattern.permute.xlu0 0
    %60 = vperm.xlu0 %59, %v42
    %v61 = vpop.permute.xlu0 %60
    %v64 = vlaneseq
    %v65 = vshrl.u32 %v64, 7
    %v66 = vsub.s32 0, %v65
    %v67 = vrot.slane %v38, %v66
    %v69 = vmul.f32 %v46, %v67
    %v70 = vmul.f32 %v51, %v67
    %v71 = vmul.f32 %v56, %v67
    %v72 = vmul.f32 %v61, %v67
    %73 = vset.pattern.permute.xlu0 32
    %74 = vperm.xlu0 %73, %v39
    %v75 = vpop.permute.xlu0 %74
    %77 = vset.pattern.permute.xlu0 32
    %78 = vperm.xlu0 %77, %v40
    %v79 = vpop.permute.xlu0 %78
    %81 = vset.pattern.permute.xlu0 32
    %82 = vperm.xlu0 %81, %v41
    %v83 = vpop.permute.xlu0 %82
    %85 = vset.pattern.permute.xlu0 32
    %86 = vperm.xlu0 %85, %v42
    %v87 = vpop.permute.xlu0 %86
    %v89 = vadd.f32 %v69, %v75
    %v90 = vadd.f32 %v70, %v79
    %v91 = vadd.f32 %v71, %v83
    %v92 = vadd.f32 %v72, %v87
    %v93 = vmax.f32 %v89, 0.0
    %v94 = vmax.f32 %v90, 0.0
    %v95 = vmax.f32 %v91, 0.0
    %v96 = vmax.f32 %v92, 0.0
    %s97 = scalar_lea.vmem [#allocation5], 32
    %v98 = vld [vmem:[%s97] sm:$0xff]
    %v99 = vld [vmem:[%s97 + $0x8] sm:$0xff]
    %v100 = vld [vmem:[%s97 + $0x10] sm:$0xff]
    %v101 = vld [vmem:[%s97 + $0x18] sm:$0xff]
    %103 = vset.pattern.permute.xlu0 32
    %104 = vperm.xlu0 %103, %v98
    %v105 = vpop.permute.xlu0 %104
    %108 = vset.pattern.permute.xlu0 32
    %109 = vperm.xlu0 %108, %v99
    %v110 = vpop.permute.xlu0 %109
    %113 = vset.pattern.permute.xlu0 32
    %114 = vperm.xlu0 %113, %v100
    %v115 = vpop.permute.xlu0 %114
    %118 = vset.pattern.permute.xlu0 32
    %119 = vperm.xlu0 %118, %v101
    %v120 = vpop.permute.xlu0 %119
    %vm122 = vcmask 261120
    %v123 = vsel %vm122, %v98, 0
    %v125 = vsel %vm122, %v99, 0
    %v127 = vsel %vm122, %v100, 0
    %v129 = vsel %vm122, %v101, 0
    %131 = vmatprep.subr.mxu0 0.0
    %132 = vmatpush1.msra.mxu0 %v93
    %133 = vmatprep.subr.mxu0 0.0
    %134 = vmatpush1.msra.mxu0 %v94
    %135 = vmatprep.subr.mxu0 0.0
    %136 = vmatpush1.msra.mxu0 %v95
    %137 = vmatprep.subr.mxu0 0.0
    %138 = vmatpush1.msra.mxu0 %v96
    %139 = vmatprep.subr.mxu0 0.0
    %140 = vmatpush1.msra.mxu0 0.0
    %141 = vmatprep.subr.mxu0 0.0
    %142 = vmatpush1.msra.mxu0 0.0
    %143 = vmatprep.subr.mxu0 0.0
    %144 = vmatpush1.msra.mxu0 0.0
    %145 = vmatprep.subr.mxu0 0.0
    %146 = vmatpush1.msra.mxu0 0.0
    %147 = vmatprep.subr.mxu0 0.0
    %148 = vmatpush1.msra.mxu0 0.0
    %149 = vmatprep.subr.mxu0 0.0
    %150 = vmatpush1.msra.mxu0 0.0
    %151 = vmatprep.subr.mxu0 0.0
    %152 = vmatpush1.msra.mxu0 0.0
    %153 = vmatprep.subr.mxu0 0.0
    %154 = vmatpush1.msra.mxu0 0.0
    %155 = vmatprep.subr.mxu0 0.0
    %156 = vmatpush1.msra.mxu0 0.0
    %157 = vmatprep.subr.mxu0 0.0
    %158 = vmatpush1.msra.mxu0 0.0
    %159 = vmatprep.subr.mxu0 0.0
    %160 = vmatpush1.msra.mxu0 0.0
    %161 = vmatprep.subr.mxu0 0.0
    %162 = vmatpush1.msra.mxu0 0.0
    %163 = vmatprep.subr.mxu0 0.0
    %164 = vmatpush1.msra.mxu0 0.0
    %165 = vmatprep.subr.mxu0 0.0
    %166 = vmatpush1.msra.mxu0 0.0
    %167 = vmatprep.subr.mxu0 0.0
    %168 = vmatpush1.msra.mxu0 0.0
    %169 = vmatprep.subr.mxu0 0.0
    %170 = vmatpush1.msra.mxu0 0.0
    %171 = vmatprep.subr.mxu0 0.0
    %172 = vmatpush1.msra.mxu0 0.0
    %173 = vmatprep.subr.mxu0 0.0
    %174 = vmatpush1.msra.mxu0 0.0
    %175 = vmatprep.subr.mxu0 0.0
    %176 = vmatpush1.msra.mxu0 0.0
    %177 = vmatprep.subr.mxu0 0.0
    %178 = vmatpush1.msra.mxu0 0.0
    %179 = vmatprep.subr.mxu0 0.0
    %180 = vmatpush1.msra.mxu0 0.0
    %181 = vmatprep.subr.mxu0 0.0
    %182 = vmatpush1.msra.mxu0 0.0
    %183 = vmatprep.subr.mxu0 0.0
    %184 = vmatpush1.msra.mxu0 0.0
    %185 = vmatprep.subr.mxu0 0.0
    %186 = vmatpush1.msra.mxu0 0.0
    %187 = vmatprep.subr.mxu0 0.0
    %188 = vmatpush1.msra.mxu0 0.0
    %189 = vmatprep.subr.mxu0 0.0
    %190 = vmatpush1.msra.mxu0 0.0
    %191 = vmatprep.subr.mxu0 0.0
    %192 = vmatpush1.msra.mxu0 0.0
    %193 = vmatprep.subr.mxu0 0.0
    %194 = vmatpush1.msra.mxu0 0.0
    %195 = vmatprep.mubr.f32.mxu0 0.0
    %196 = vmatmul.mubr.f32.gmra.mrb[0].mxu0 %v123
    %v197 = vpop.f32.mrb[0].mxu0
    %v198 = vadd.f32 %v105, %v197
    %v199 = vpop.f32.mrb[0].mxu0
    %200 = vmatprep.mubr.f32.mxu0 0.0
    %201 = vmatmul.mubr.f32.gmra.mrb[0].mxu0 %v125
    %v202 = vpop.f32.mrb[0].mxu0
    %v203 = vadd.f32 %v110, %v202
    %v204 = vpop.f32.mrb[0].mxu0
    %205 = vmatprep.mubr.f32.mxu0 0.0
    %206 = vmatmul.mubr.f32.gmra.mrb[0].mxu0 %v127
    %v207 = vpop.f32.mrb[0].mxu0
    %v208 = vadd.f32 %v115, %v207
    %v209 = vpop.f32.mrb[0].mxu0
    %210 = vmatprep.mubr.f32.mxu0 0.0
    %211 = vmatmul.mubr.f32.gmra.mrb[0].mxu0 %v129
    %v212 = vpop.f32.mrb[0].mxu0
    %v213 = vadd.f32 %v120, %v212
    %v214 = vpop.f32.mrb[0].mxu0
    %215 = vdwg.mxu0
    %v216 = vmax.f32 %v198, 0.0
    %v217 = vmax.f32 %v203, 0.0
    %v218 = vmax.f32 %v208, 0.0
    %v219 = vmax.f32 %v213, 0.0
    %s220 = scalar_lea.vmem [#allocation5], 64
    %v221 = vld [vmem:[%s220] sm:$0xff]
    %223 = vset.pattern.permute.xlu0 32
    %224 = vperm.xlu0 %223, %v221
    %v225 = vpop.permute.xlu0 %224
    %v227 = vsel %vm122, %v221, 0
    %229 = vmatprep.subr.mxu0 0.0
    %230 = vmatpush1.msra.mxu0 %v216
    %231 = vmatprep.subr.mxu0 0.0
    %232 = vmatpush1.msra.mxu0 %v217
    %233 = vmatprep.subr.mxu0 0.0
    %234 = vmatpush1.msra.mxu0 %v218
    %235 = vmatprep.subr.mxu0 0.0
    %236 = vmatpush1.msra.mxu0 %v219
    %237 = vmatprep.subr.mxu0 0.0
    %238 = vmatpush1.msra.mxu0 0.0
    %239 = vmatprep.subr.mxu0 0.0
    %240 = vmatpush1.msra.mxu0 0.0
    %241 = vmatprep.subr.mxu0 0.0
    %242 = vmatpush1.msra.mxu0 0.0
    %243 = vmatprep.subr.mxu0 0.0
    %244 = vmatpush1.msra.mxu0 0.0
    %245 = vmatprep.subr.mxu0 0.0
    %246 = vmatpush1.msra.mxu0 0.0
    %247 = vmatprep.subr.mxu0 0.0
    %248 = vmatpush1.msra.mxu0 0.0
    %249 = vmatprep.subr.mxu0 0.0
    %250 = vmatpush1.msra.mxu0 0.0
    %251 = vmatprep.subr.mxu0 0.0
    %252 = vmatpush1.msra.mxu0 0.0
    %253 = vmatprep.subr.mxu0 0.0
    %254 = vmatpush1.msra.mxu0 0.0
    %255 = vmatprep.subr.mxu0 0.0
    %256 = vmatpush1.msra.mxu0 0.0
    %257 = vmatprep.subr.mxu0 0.0
    %258 = vmatpush1.msra.mxu0 0.0
    %259 = vmatprep.subr.mxu0 0.0
    %260 = vmatpush1.msra.mxu0 0.0
    %261 = vmatprep.subr.mxu0 0.0
    %262 = vmatpush1.msra.mxu0 0.0
    %263 = vmatprep.subr.mxu0 0.0
    %264 = vmatpush1.msra.mxu0 0.0
    %265 = vmatprep.subr.mxu0 0.0
    %266 = vmatpush1.msra.mxu0 0.0
    %267 = vmatprep.subr.mxu0 0.0
    %268 = vmatpush1.msra.mxu0 0.0
    %269 = vmatprep.subr.mxu0 0.0
    %270 = vmatpush1.msra.mxu0 0.0
    %271 = vmatprep.subr.mxu0 0.0
    %272 = vmatpush1.msra.mxu0 0.0
    %273 = vmatprep.subr.mxu0 0.0
    %274 = vmatpush1.msra.mxu0 0.0
    %275 = vmatprep.subr.mxu0 0.0
    %276 = vmatpush1.msra.mxu0 0.0
    %277 = vmatprep.subr.mxu0 0.0
    %278 = vmatpush1.msra.mxu0 0.0
    %279 = vmatprep.subr.mxu0 0.0
    %280 = vmatpush1.msra.mxu0 0.0
    %281 = vmatprep.subr.mxu0 0.0
    %282 = vmatpush1.msra.mxu0 0.0
    %283 = vmatprep.subr.mxu0 0.0
    %284 = vmatpush1.msra.mxu0 0.0
    %285 = vmatprep.subr.mxu0 0.0
    %286 = vmatpush1.msra.mxu0 0.0
    %287 = vmatprep.subr.mxu0 0.0
    %288 = vmatpush1.msra.mxu0 0.0
    %289 = vmatprep.subr.mxu0 0.0
    %290 = vmatpush1.msra.mxu0 0.0
    %291 = vmatprep.subr.mxu0 0.0
    %292 = vmatpush1.msra.mxu0 0.0
    %293 = vmatprep.mubr.f32.mxu0 0.0
    %294 = vmatmul.mubr.f32.gmra.mrb[0].mxu0 %v227
    %v295 = vpop.f32.mrb[0].mxu0
    %v296 = vadd.f32 %v225, %v295
    %v297 = vpop.f32.mrb[0].mxu0
    %298 = vdwg.mxu0
    %299 = vst [vmem:[#allocation7] sm:$0xff] %v296
    // Predicated region
    $region18: #{tpu_custom_call.1} parent=1 // pred_check
      _
    $region19: #{tpu_custom_call.1} parent=1 // pred_check_branch
      %301 = sbr.rel (0) target = $region21
    $region20: #{tpu_custom_call.1} parent=1 // pred_region
      %s303 = ssub.s32 128, 128
      %304 = vsyncadd [#allocation4], %s303
      %s306 = sshll.u32 [#allocation7], 4
      %s307 = int_to_ptr.vmem [resolvable:$true] %s306
      %309 = dma.vmem_to_hbm [thread:$0]  %s307, 128, %s2, [#allocation4]
    $region21: #{tpu_custom_call.1} parent=1 // pred_fallthru
      _
    // Predicated region
    $region22: #{tpu_custom_call.1} parent=1 // pred_check
      _
    $region23: #{tpu_custom_call.1} parent=1 // pred_check_branch
      %311 = sbr.rel (0) target = $region25
    $region24: #{tpu_custom_call.1} parent=1 // pred_region
      %312 = dma.done [#allocation4], 128
    $region25: #{tpu_custom_call.1} parent=1 // pred_fallthru
      _
    %313 = vsyncpa [#allocation3], 1
    %314 = vsyncpa [#allocation6], 1
    %315 = vsyncpa [#allocation4], 1

</llo_original>
